<compile_context>
chip_gen: v5e
topology: v5e:2x2
jax: 0.10.0
libtpu: 0.0.40
codegen_flags: <defaults>
</compile_context>

<pallas_src>
import functools

import jax
import jax.numpy as jnp
from jax.experimental import pallas as pl
from jax.experimental.pallas import tpu as pltpu


def _prenorm_conv1x1_kernel(x_ref, w_ref, b_ref, o_ref, *, eps, inv_c):
    # x_ref: (1, C, TL)   w_ref: (C_out, C_in) with the LayerNorm gain folded in
    # b_ref: (C, 1)       o_ref: (1, C, TL)
    x = x_ref[0].astype(jnp.float32)                         # (C, TL)

    # Single-pass mean / population variance over the channel (sublane) axis.
    m1 = jnp.sum(x, axis=0, keepdims=True) * inv_c           # (1, TL)  E[x]
    m2 = jnp.sum(x * x, axis=0, keepdims=True) * inv_c       # (1, TL)  E[x^2]
    var = m2 - m1 * m1

    xn = (x - m1) * jax.lax.rsqrt(var + eps)                 # gain is inside w

    # fn = 1x1 conv: out[co, l] = sum_ci w'[co, ci] * xn[ci, l] + b[co]
    # xn is cast to w's dtype (bf16 when mxu_bf16=True); accumulate in f32.
    y = jnp.dot(w_ref[...], xn.astype(w_ref.dtype),
                preferred_element_type=jnp.float32) + b_ref[...]
    o_ref[0] = y.astype(o_ref.dtype)


def _pick_tile_l(L, C, elem_bytes, budget_bytes=48 * 1024 * 1024):
    """Largest lane tile (multiple of 128) dividing L whose double-buffered
    in+out tiles fit the VMEM budget; falls back to the full extent."""
    for cand in (8192, 4096, 2048, 1024, 512, 256, 128):
        if L % cand == 0 and 2 * 2 * C * cand * elem_bytes <= budget_bytes:
            return cand
    return L


def prenorm_conv1x1(x_nchw, g, w, b, *, mxu_bf16=False, tile_l=None):
    """PreNorm(dim, Conv2d(dim, dim, 1)) forward.

    x_nchw: (B, C, H, W)
    g:      (C,)      LayerNorm gain (PyTorch init: ones)
    w:      (C, C)    Conv2d weight as (C_out, C_in) (PyTorch weight with the
                      trailing 1x1 squeezed — NOT transposed)
    b:      (C,)      Conv2d bias
    """
    B, C, H, W = x_nchw.shape
    assert w.shape == (C, C), "expected conv1x1 weight as (C_out, C_in)"
    assert g.shape == (C,) and b.shape == (C,)
    eps = 1e-5 if x_nchw.dtype == jnp.float32 else 1e-3  # matches the PyTorch module

    # Stay in NCHW: (B, C, H, W) -> (B, C, L) is a free reshape (no transpose,
    # no extra HBM traffic). Channels on sublanes, pixels on lanes.
    L = H * W
    x3d = x_nchw.reshape(B, C, L)
    elem_bytes = jnp.dtype(x_nchw.dtype).itemsize
    if tile_l is None:
        tile_l = _pick_tile_l(L, C, elem_bytes)
    assert (L % tile_l == 0) or (tile_l == L)

    # Fold the LayerNorm gain into the (linear) 1x1 conv weight, and cast the
    # constants once here; their index maps are constant, so any in-kernel
    # work on them would be repeated every grid step.
    w_dtype = jnp.bfloat16 if mxu_bf16 else jnp.float32
    w2d = (w.astype(jnp.float32) * g.astype(jnp.float32)[None, :]).astype(w_dtype)
    b2d = b.astype(jnp.float32).reshape(C, 1)

    grid = (B, pl.cdiv(L, tile_l))

    # Double-buffered x/out tiles + resident constants, with headroom; capped
    # at 64 MiB so the same setting is valid on v7x (64 MiB VMEM).
    tile_bytes = 2 * 2 * C * tile_l * elem_bytes
    const_bytes = w2d.size * w2d.dtype.itemsize + C * 4
    vmem_limit = int(min(max(4 * (tile_bytes + const_bytes) + (4 << 20), 16 << 20),
                         64 << 20))

    n_pix = B * L
    cost = pl.CostEstimate(
        flops=int(2 * C * C * n_pix + 8 * C * n_pix),
        transcendentals=int(n_pix),
        bytes_accessed=int(2 * n_pix * C * elem_bytes + C * C * w2d.dtype.itemsize),
    )

    kernel = functools.partial(_prenorm_conv1x1_kernel, eps=eps, inv_c=1.0 / C)

    out3d = pl.pallas_call(
        kernel,
        out_shape=jax.ShapeDtypeStruct((B, C, L), x_nchw.dtype),
        grid_spec=pltpu.PrefetchScalarGridSpec(
            num_scalar_prefetch=0,
            grid=grid,
            in_specs=[
                pl.BlockSpec((1, C, tile_l), lambda bi, li: (bi, 0, li)),  # x tile
                pl.BlockSpec((C, C), lambda bi, li: (0, 0)),               # w' (resident)
                pl.BlockSpec((C, 1), lambda bi, li: (0, 0)),               # bias (resident)
            ],
            out_specs=pl.BlockSpec((1, C, tile_l), lambda bi, li: (bi, 0, li)),
        ),
        compiler_params=pltpu.CompilerParams(
            dimension_semantics=("parallel", "parallel"),
            vmem_limit_bytes=vmem_limit,
        ),
        cost_estimate=cost,
    )(x3d, w2d, b2d)
    # If profiling ever shows exposed input DMA for very small C, add
    # pipeline_mode=pl.Buffered(3) to the x BlockSpec.

    return out3d.reshape(B, C, H, W)


def prenorm_reference(x_nchw, g, w, b):
    """Pure-JAX reference matching the PyTorch PreNorm(dim, Conv2d(dim, dim, 1))."""
    eps = 1e-5 if x_nchw.dtype == jnp.float32 else 1e-3
    mean = jnp.mean(x_nchw, axis=1, keepdims=True)
    var = jnp.mean((x_nchw - mean) ** 2, axis=1, keepdims=True)
    xn = (x_nchw - mean) * jax.lax.rsqrt(var + eps) * g.reshape(1, -1, 1, 1)
    # w is (C_out, C_in): out[b, d, h, w] = sum_c w[d, c] * xn[b, c, h, w] + b[d]
    y = jnp.einsum("bchw,dc->bdhw", xn, w) + b.reshape(1, -1, 1, 1)
    return y


if __name__ == "__main__":
    key = jax.random.PRNGKey(0)
    B, C, H, W = 2, 4, 16, 16
    k1, k2, k3 = jax.random.split(key, 3)

    x = jax.random.normal(k1, (B, C, H, W), dtype=jnp.float32)
    g = jnp.ones((C,), dtype=jnp.float32)                       # LayerNorm.g init = ones
    w = jax.random.normal(k2, (C, C), dtype=jnp.float32) * 0.1  # conv1x1 weight (C_out, C_in)
    b = jax.random.normal(k3, (C,), dtype=jnp.float32) * 0.1

    ref = prenorm_reference(x, g, w, b)

    # f32 MXU path (module semantics for f32 inputs).
    out = jax.block_until_ready(prenorm_conv1x1(x, g, w, b))
    assert out.shape == (B, C, H, W)
    assert jnp.allclose(out, ref, atol=1e-4, rtol=1e-4), \
        f"f32 path max err {jnp.max(jnp.abs(out - ref))}"

    # bf16-fed MXU path (throughput option on v5e/v6e/v7x); looser tolerance.
    out_bf16 = jax.block_until_ready(prenorm_conv1x1(x, g, w, b, mxu_bf16=True))
    assert jnp.allclose(out_bf16, ref, atol=3e-2, rtol=3e-2), \
        f"bf16 path max err {jnp.max(jnp.abs(out_bf16 - ref))}"

    print("KERNEL_OK")
</pallas_src>

<mosaic_0001>
module attributes {stable_mosaic.version = 11 : i64} {
  func.func @_prenorm_conv1x1_kernel(%arg0: i32, %arg1: i32, %arg2: memref<1x4x256xf32, #tpu.memory_space<vmem>>, %arg3: memref<4x4xf32, #tpu.memory_space<vmem>>, %arg4: memref<4x1xf32, #tpu.memory_space<vmem>>, %arg5: memref<1x4x256xf32, #tpu.memory_space<vmem>>) attributes {dimension_semantics = [#tpu.dimension_semantics<parallel>, #tpu.dimension_semantics<parallel>], iteration_bounds = array<i64: 2, 1>, scalar_prefetch = 0 : i64, scratch_operands = 0 : i64, tpu.core_type = #tpu.core_type<tc>, window_params = [{transform_indices = @transform_0, window_bounds = array<i64: 1, 4, 256>}, {pipeline_mode = #tpu.pipeline_mode<synchronous>, transform_indices = @transform_1, window_bounds = array<i64: 4, 4>}, {pipeline_mode = #tpu.pipeline_mode<synchronous>, transform_indices = @transform_2, window_bounds = array<i64: 4, 1>}, {transform_indices = @transform_3, window_bounds = array<i64: 1, 4, 256>}]} {
    %c0 = arith.constant 0 : index
    %c0_0 = arith.constant 0 : index
    %c0_1 = arith.constant 0 : index
    %0 = vector.load %arg2[%c0, %c0_0, %c0_1] : memref<1x4x256xf32, #tpu.memory_space<vmem>>, vector<1x4x256xf32>
    %1 = vector.shape_cast %0 : vector<1x4x256xf32> to vector<4x256xf32>
    %cst = arith.constant dense<0.000000e+00> : vector<256xf32>
    %2 = vector.multi_reduction <add>, %1, %cst [0] : vector<4x256xf32> to vector<256xf32>
    %3 = vector.shape_cast %2 : vector<256xf32> to vector<1x256xf32>
    %cst_2 = arith.constant 2.500000e-01 : f32
    %4 = vector.broadcast %cst_2 : f32 to vector<1x256xf32>
    %5 = arith.mulf %3, %4 : vector<1x256xf32>
    %6 = arith.mulf %1, %1 : vector<4x256xf32>
    %cst_3 = arith.constant dense<0.000000e+00> : vector<256xf32>
    %7 = vector.multi_reduction <add>, %6, %cst_3 [0] : vector<4x256xf32> to vector<256xf32>
    %8 = vector.shape_cast %7 : vector<256xf32> to vector<1x256xf32>
    %cst_4 = arith.constant 2.500000e-01 : f32
    %9 = vector.broadcast %cst_4 : f32 to vector<1x256xf32>
    %10 = arith.mulf %8, %9 : vector<1x256xf32>
    %11 = arith.mulf %5, %5 : vector<1x256xf32>
    %12 = arith.subf %10, %11 : vector<1x256xf32>
    %13 = vector.broadcast %5 : vector<1x256xf32> to vector<4x256xf32>
    %14 = arith.subf %1, %13 : vector<4x256xf32>
    %cst_5 = arith.constant 9.99999974E-6 : f32
    %15 = vector.broadcast %cst_5 : f32 to vector<1x256xf32>
    %16 = arith.addf %12, %15 : vector<1x256xf32>
    %17 = math.rsqrt %16 : vector<1x256xf32>
    %18 = vector.broadcast %17 : vector<1x256xf32> to vector<4x256xf32>
    %19 = arith.mulf %14, %18 : vector<4x256xf32>
    %c0_6 = arith.constant 0 : index
    %c0_7 = arith.constant 0 : index
    %20 = vector.load %arg3[%c0_6, %c0_7] : memref<4x4xf32, #tpu.memory_space<vmem>>, vector<4x4xf32>
    %cst_8 = arith.constant dense<0.000000e+00> : vector<4x256xf32>
    %21 = tpu.matmul %20, %19, %cst_8 {dimension_numbers = #tpu.dot_dimension_numbers<[1], [0], [0], [1], [0, 0, 1, 1], [], []>} : vector<4x4xf32>, vector<4x256xf32>, vector<4x256xf32> -> vector<4x256xf32>
    %c0_9 = arith.constant 0 : index
    %c0_10 = arith.constant 0 : index
    %22 = vector.load %arg4[%c0_9, %c0_10] : memref<4x1xf32, #tpu.memory_space<vmem>>, vector<4x1xf32>
    %23 = vector.broadcast %22 : vector<4x1xf32> to vector<4x256xf32>
    %24 = arith.addf %21, %23 : vector<4x256xf32>
    %c0_11 = arith.constant 0 : index
    %c0_12 = arith.constant 0 : index
    %c0_13 = arith.constant 0 : index
    %25 = vector.load %arg5[%c0_11, %c0_12, %c0_13] : memref<1x4x256xf32, #tpu.memory_space<vmem>>, vector<1x4x256xf32>
    %26 = vector.shape_cast %25 : vector<1x4x256xf32> to vector<4x256xf32>
    %27 = vector.shape_cast %24 : vector<4x256xf32> to vector<1x4x256xf32>
    tpu.vector_store %arg5[%c0_11, %c0_12, %c0_13], %27 {strides = array<i32>} : memref<1x4x256xf32, #tpu.memory_space<vmem>>, vector<1x4x256xf32>,
    return
  }
  func.func @transform_0(%arg0: i32, %arg1: i32) -> (i32, i32, i32) {
    %c0_i32 = arith.constant 0 : i32
    %c0_i32_0 = arith.constant 0 : i32
    return %arg0, %c0_i32, %arg1 : i32, i32, i32
  }
  func.func @transform_1(%arg0: i32, %arg1: i32) -> (i32, i32) {
    %c0_i32 = arith.constant 0 : i32
    %c0_i32_0 = arith.constant 0 : i32
    %c0_i32_1 = arith.constant 0 : i32
    return %c0_i32, %c0_i32_0 : i32, i32
  }
  func.func @transform_2(%arg0: i32, %arg1: i32) -> (i32, i32) {
    %c0_i32 = arith.constant 0 : i32
    %c0_i32_0 = arith.constant 0 : i32
    %c0_i32_1 = arith.constant 0 : i32
    return %c0_i32, %c0_i32_0 : i32, i32
  }
  func.func @transform_3(%arg0: i32, %arg1: i32) -> (i32, i32, i32) {
    %c0_i32 = arith.constant 0 : i32
    %c0_i32_0 = arith.constant 0 : i32
    return %arg0, %c0_i32, %arg1 : i32, i32, i32
  }
}

</mosaic_0001>

<llo_original>
// kernel: tpu_custom_call.1
$region0: #{tpu_custom_call.1}
  #allocation0 [shape = 'u32[]', space=smem, size = 0x4, offset = 0x4, fixed_abs, tag = 'smem constant byte address 0x4 - core index']
  #allocation1 [shape = 'u32[72,128]{1,0:T(1,128)}', space=vmem, size = 0x9000, scoped, tag = 'internal scratch']
  %s0 = inlined_call_operand.hbm [shape: f32[2,4,256], index: 0, kind: input, shape index: {}]
  %s1 = inlined_call_operand.vmem [shape: f32[4,4], index: 1, kind: input, shape index: {}]
  %s2 = inlined_call_operand.vmem [shape: f32[4,1], index: 2, kind: input, shape index: {}]
  %s3 = inlined_call_operand.hbm [shape: f32[2,4,256], index: 3, kind: output, shape index: {}]
  %s4 = sld [smem:[#allocation0]]
  $region49: #{tpu_custom_call.1} parent=0
    _
  %s6 = ssub.s32 1, %s4
  %s7 = scalar_select 0, %s6, %s4
  $region1: #{tpu_custom_call.1} parent=0
    #allocation2 [shape = 'u8[8192]{0}', space=vmem, size = 0x2000, scoped, tag = 'input window, operand 0']
    #allocation3 [shape = 's32[2]{0}', space=sflag, size = 0x8, scoped, tag = 'scoped memory for tpu_custom_call.1']
    #allocation4 [shape = 's32[2]{0}', space=sflag, size = 0x8, scoped, tag = 'scoped memory for tpu_custom_call.1']
    #allocation5 [shape = 'u8[8192]{0}', space=vmem, size = 0x2000, scoped, tag = 'output window, operand 0']
    %8 = vsyncpa [#allocation3], 0
    %s9 = scalar_lea.sflag [#allocation3], 1
    %10 = vsyncpa %s9, 0
    %11 = vsyncpa [#allocation4], 0
    %s12 = scalar_lea.sflag [#allocation4], 1
    %13 = vsyncpa %s12, 0
    loop: start=0, step=1, limit=4
    $region2: #{tpu_custom_call.1} parent=1 // loop_pre_header
      _
    $region3: #{tpu_custom_call.1} parent=1 // loop_header
      %s15 = sphi 0, %s19
      %p16 = scmp.ge.s32.totalorder %s15, 4
      %s22 = sphi 0, %s34
      %s23 = sphi 0, %s30
      %s24 = sphi 0, %s22
      %s25 = sphi 0, %s23
      %s26 = sphi 0, %s24
      %s27 = sphi 0, %s25
      %s39 = sphi 0, %s41
      %s42 = sphi 0, %s39
      %s43 = sphi 0, %s42
      %s59 = sphi 0, %s43
      %s63 = sphi 0, %s63
      %s65 = sphi 0, %s63
      %s66 = sphi 0, %s65
      %s80 = sphi 0, %s66
      %s84 = sphi 0, %s84
      %s86 = sphi 0, %s84
      %s87 = sphi 0, %s86
      %s101 = sphi 0, %s87
      %s109 = sphi 0, %s111
      %s112 = sphi 0, %s109
      %s113 = sphi 0, %s112
      %s129 = sphi 0, %s113
    $region4: #{tpu_custom_call.1} parent=1 // loop_header_branch
      %18 = sbr.rel (%p16) target = $region8
    $region5: #{tpu_custom_call.1} parent=1 // loop_body
      %s20 = ssub.s32 %s15, 1
      %s21 = ssub.s32 %s15, 2
      %s28 = sadd.s32 1, %s23
      %p29 = scmp.ge.s32.totalorder %s28, 1
      %s30 = scalar_select %p29, 0, %s28
      %s31 = sadd.s32 1, %s22
      %s32 = scalar_select %p29, %s31, %s22
      %p33 = scmp.ge.s32.totalorder %s32, 2
      %s34 = scalar_select %p33, 0, %s32
      %s35 = ssub.s32 %s22, %s34
      %s36 = ssub.s32 %s23, %s30
      %s37 = sor.u32 %s35, %s36
      %p38 = scmp.eq.s32.totalorder %s37, 0
      %s40 = sadd.s32 %s39, 1
      %s41 = scalar_select %p38, %s39, %s40
      %p44 = pneg %p38
      %p45 = scmp.eq.s32.totalorder %s15, 1
      %p46 = por %p44, %p45
      %p47 = scmp.ne.s32.totalorder %s39, %s42
      %p48 = scmp.eq.s32.totalorder %s15, 0
      %p49 = por %p47, %p48
      %p50 = scmp.ne.s32.totalorder %s39, %s42
      %p51 = scmp.eq.s32.totalorder %s20, 1
      %p52 = por %p50, %p51
      %p53 = scmp.ne.s32.totalorder %s42, %s43
      %p54 = scmp.eq.s32.totalorder %s20, 0
      %p55 = por %p53, %p54
      %p56 = scmp.ne.s32.totalorder %s42, %s43
      %p57 = scmp.eq.s32.totalorder %s21, 1
      %p58 = por %p56, %p57
      %p60 = scmp.ne.s32.totalorder %s43, %s59
      %p61 = scmp.eq.s32.totalorder %s21, 0
      %p62 = por %p60, %p61
      %s64 = sadd.s32 %s63, 1
      %p67 = scmp.eq.s32.totalorder %s15, 1
      %p68 = scmp.ne.s32.totalorder %s63, %s65
      %p69 = scmp.eq.s32.totalorder %s15, 0
      %p70 = por %p68, %p69
      %p71 = scmp.ne.s32.totalorder %s63, %s65
      %p72 = scmp.eq.s32.totalorder %s20, 1
      %p73 = por %p71, %p72
      %p74 = scmp.ne.s32.totalorder %s65, %s66
      %p75 = scmp.eq.s32.totalorder %s20, 0
      %p76 = por %p74, %p75
      %p77 = scmp.ne.s32.totalorder %s65, %s66
      %p78 = scmp.eq.s32.totalorder %s21, 1
      %p79 = por %p77, %p78
      %p81 = scmp.ne.s32.totalorder %s66, %s80
      %p82 = scmp.eq.s32.totalorder %s21, 0
      %p83 = por %p81, %p82
      %s85 = sadd.s32 %s84, 1
      %p88 = scmp.eq.s32.totalorder %s15, 1
      %p89 = scmp.ne.s32.totalorder %s84, %s86
      %p90 = scmp.eq.s32.totalorder %s15, 0
      %p91 = por %p89, %p90
      %p92 = scmp.ne.s32.totalorder %s84, %s86
      %p93 = scmp.eq.s32.totalorder %s20, 1
      %p94 = por %p92, %p93
      %p95 = scmp.ne.s32.totalorder %s86, %s87
      %p96 = scmp.eq.s32.totalorder %s20, 0
      %p97 = por %p95, %p96
      %p98 = scmp.ne.s32.totalorder %s86, %s87
      %p99 = scmp.eq.s32.totalorder %s21, 1
      %p100 = por %p98, %p99
      %p102 = scmp.ne.s32.totalorder %s87, %s101
      %p103 = scmp.eq.s32.totalorder %s21, 0
      %p104 = por %p102, %p103
      %s105 = ssub.s32 %s22, %s34
      %s106 = ssub.s32 %s23, %s30
      %s107 = sor.u32 %s105, %s106
      %p108 = scmp.eq.s32.totalorder %s107, 0
      %s110 = sadd.s32 %s109, 1
      %s111 = scalar_select %p108, %s109, %s110
      %p114 = pneg %p108
      %p115 = scmp.eq.s32.totalorder %s15, 1
      %p116 = por %p114, %p115
      %p117 = scmp.ne.s32.totalorder %s109, %s112
      %p118 = scmp.eq.s32.totalorder %s15, 0
      %p119 = por %p117, %p118
      %p120 = scmp.ne.s32.totalorder %s109, %s112
      %p121 = scmp.eq.s32.totalorder %s20, 1
      %p122 = por %p120, %p121
      %p123 = scmp.ne.s32.totalorder %s112, %s113
      %p124 = scmp.eq.s32.totalorder %s20, 0
      %p125 = por %p123, %p124
      %p126 = scmp.ne.s32.totalorder %s112, %s113
      %p127 = scmp.eq.s32.totalorder %s21, 1
      %p128 = por %p126, %p127
      %p130 = scmp.ne.s32.totalorder %s113, %s129
      %p131 = scmp.eq.s32.totalorder %s21, 0
      %p132 = por %p130, %p131
      %p133 = scmp.le.s32.totalorder 1, %s15
      %p134 = scmp.lt.s32.totalorder %s15, 3
      %p135 = pnand %p133, %p134
      %p136 = pneg %p135
      // Predicated region
      $region9: #{tpu_custom_call.1} parent=5 // pred_check
        _
      $region10: #{tpu_custom_call.1} parent=5 // pred_check_branch
        %138 = sbr.rel (%p135) target = $region12
      $region11: #{tpu_custom_call.1} parent=5 // pred_region
        %s139 = ssub.s32 %s15, 1
        // Predicated region
        $region13: #{tpu_custom_call.1} parent=11 // pred_check
          %p140 = pneg %p76
        $region14: #{tpu_custom_call.1} parent=11 // pred_check_branch
          %142 = sbr.rel (%p140) target = $region16
        $region15: #{tpu_custom_call.1} parent=11 // pred_region
          _
        $region16: #{tpu_custom_call.1} parent=11 // pred_fallthru
          _
        // Predicated region
        $region17: #{tpu_custom_call.1} parent=11 // pred_check
          %p143 = pneg %p97
        $region18: #{tpu_custom_call.1} parent=11 // pred_check_branch
          %145 = sbr.rel (%p143) target = $region20
        $region19: #{tpu_custom_call.1} parent=11 // pred_region
          _
        $region20: #{tpu_custom_call.1} parent=11 // pred_fallthru
          _
      $region12: #{tpu_custom_call.1} parent=5 // pred_fallthru
        _
      %p146 = scmp.lt.s32.totalorder %s15, 2
      // Predicated region
      $region21: #{tpu_custom_call.1} parent=5 // pred_check
        %p147 = pneg %p146
      $region22: #{tpu_custom_call.1} parent=5 // pred_check_branch
        %149 = sbr.rel (%p147) target = $region24
      $region23: #{tpu_custom_call.1} parent=5 // pred_region
        // Predicated region
        $region25: #{tpu_custom_call.1} parent=23 // pred_check
          %p150 = pneg %p49
        $region26: #{tpu_custom_call.1} parent=23 // pred_check_branch
          %152 = sbr.rel (%p150) target = $region28
        $region27: #{tpu_custom_call.1} parent=23 // pred_region
          %s153 = sand.u32 %s39, 1
          %s154 = scalar_lea.sflag [#allocation3], %s153
          %s155 = sand.u32 %s39, 1
          %s156 = smul.addr %s155, 8
          %s157 = scalar_lea.vmem [#allocation2], %s156
          %s158 = smul.u32 2, %s23
          %160 = vsyncadd %s154, 0
          %s161 = smul.addr %s22, 2
          %s162 = sadd.s32 %s158, %s161
          %s163 = smul.addr %s162, 4
          %s164 = scalar_lea.hbm %s0, %s163
          %s166 = sshll.u32 %s164, 4
          %s167 = int_to_ptr.hbm [resolvable:$true] %s166
          %s168 = sshll.u32 %s157, 4
          %s169 = int_to_ptr.vmem [resolvable:$true] %s168
          %171 = dma.hbm_to_vmem [thread:$0]  %s167, 128, %s169, %s154
        $region28: #{tpu_custom_call.1} parent=23 // pred_fallthru
          _
      $region24: #{tpu_custom_call.1} parent=5 // pred_fallthru
        _
      %p172 = scmp.le.s32.totalorder 1, %s15
      %p173 = scmp.lt.s32.totalorder %s15, 3
      %p174 = pnand %p172, %p173
      %p175 = pneg %p174
      // Predicated region
      $region29: #{tpu_custom_call.1} parent=5 // pred_check
        _
      $region30: #{tpu_custom_call.1} parent=5 // pred_check_branch
        %177 = sbr.rel (%p174) target = $region32
      $region31: #{tpu_custom_call.1} parent=5 // pred_region
        %s178 = ssub.s32 %s15, 1
        %s179 = sand.u32 %s42, 1
        %s180 = scalar_lea.sflag [#allocation3], %s179
        %s181 = sand.u32 %s42, 1
        %s182 = smul.addr %s181, 8
        %s183 = scalar_lea.vmem [#allocation2], %s182
        // Predicated region
        $region33: #{tpu_custom_call.1} parent=31 // pred_check
          %p184 = pneg %p55
        $region34: #{tpu_custom_call.1} parent=31 // pred_check_branch
          %186 = sbr.rel (%p184) target = $region36
        $region35: #{tpu_custom_call.1} parent=31 // pred_region
          %188 = dma.done %s180, 128
        $region36: #{tpu_custom_call.1} parent=31 // pred_fallthru
          _
        %s189 = sand.u32 %s42, 1
        %s190 = scalar_lea.sflag [#allocation3], %s189
        %s191 = sand.u32 %s42, 1
        %s192 = smul.addr %s191, 8
        %s193 = scalar_lea.vmem [#allocation2], %s192
        %p194 = pneg %p55
        %p195 = pneg %p52
        %p196 = pneg %p76
        %p197 = pneg %p73
        %p198 = pneg %p97
        %p199 = pneg %p94
        %p200 = pneg %p125
        %p201 = pneg %p122
        %s202 = sand.u32 %s112, 1
        %s203 = scalar_lea.sflag [#allocation4], %s202
        %s204 = sand.u32 %s112, 1
        %s205 = smul.addr %s204, 8
        %s206 = scalar_lea.vmem [#allocation5], %s205
        %s207 = smul.u32 2, %s25
        %s208 = smul.u32 2, %s25
        %v209 = vld [vmem:[%s183] sm:$0xff]
        %211 = vst [vmem:[#allocation1] ss:$2 sm:$0xff] %v209
        %v212 = vld.sshfl [vmem:[#allocation1] sm:$0xff pattern:$0x75316420]
        %v213 = vld.sshfl [vmem:[#allocation1 + $0x8] sm:$0xff pattern:$0x75316420]
        %vm216 = vcmask 1043456
        %v217 = vsel %vm216, %v212, 0.0
        %v218 = vrot.slane %v217, 4
        %v219 = vadd.f32 %v217, %v218
        %v220 = vrot.slane %v219, 2
        %v221 = vadd.f32 %v219, %v220
        %v222 = vrot.slane %v221, 1
        %v223 = vadd.f32 %v221, %v222
        %v224 = vsel %vm216, %v213, 0.0
        %v225 = vrot.slane %v224, 4
        %v226 = vadd.f32 %v224, %v225
        %v227 = vrot.slane %v226, 2
        %v228 = vadd.f32 %v226, %v227
        %v229 = vrot.slane %v228, 1
        %v230 = vadd.f32 %v228, %v229
        %v231 = vmul.f32 %v223, 0.25
        %v232 = vmul.f32 %v230, 0.25
        %v233 = vmul.f32 %v209, %v209
        %235 = vst [vmem:[#allocation1] ss:$2 sm:$0xff] %v233
        %v236 = vld.sshfl [vmem:[#allocation1] sm:$0xff pattern:$0x75316420]
        %v237 = vld.sshfl [vmem:[#allocation1 + $0x8] sm:$0xff pattern:$0x75316420]
        %v240 = vsel %vm216, %v236, 0.0
        %v241 = vrot.slane %v240, 4
        %v242 = vadd.f32 %v240, %v241
        %v243 = vrot.slane %v242, 2
        %v244 = vadd.f32 %v242, %v243
        %v245 = vrot.slane %v244, 1
        %v246 = vadd.f32 %v244, %v245
        %v247 = vsel %vm216, %v237, 0.0
        %v248 = vrot.slane %v247, 4
        %v249 = vadd.f32 %v247, %v248
        %v250 = vrot.slane %v249, 2
        %v251 = vadd.f32 %v249, %v250
        %v252 = vrot.slane %v251, 1
        %v253 = vadd.f32 %v251, %v252
        %v254 = vmul.f32 %v246, 0.25
        %v255 = vmul.f32 %v253, 0.25
        %v256 = vmul.f32 %v231, %v231
        %v257 = vmul.f32 %v232, %v232
        %v258 = vsub.f32 %v254, %v256
        %v259 = vsub.f32 %v255, %v257
        %v262 = vrot.slane %v232, 4
        %v263 = vsel %vm216, %v231, %v262
        %v265 = vsub.f32 %v209, %v263
        %v266 = vadd.f32 %v258, 1e-05
        %v267 = vadd.f32 %v259, 1e-05
        %v268 = vrsqrt.pop %v266
        %v269 = vmul.f32 %v268, %v266
        %v270 = vmul.f32 %v269, %v268
        %v271 = vmul.f32 0.5, %v270
        %v272 = vsub.f32 1.5, %v271
        %v273 = vmul.f32 %v268, %v272
        %vm274 = vweird.f32 %v266
        %vm275 = vweird.f32 %v268
        %vm276 = vmor %vm274, %vm275
        %v277 = vsel %vm276, %v268, %v273
        %v278 = vrsqrt.pop %v267
        %v279 = vmul.f32 %v278, %v267
        %v280 = vmul.f32 %v279, %v278
        %v281 = vmul.f32 0.5, %v280
        %v282 = vsub.f32 1.5, %v281
        %v283 = vmul.f32 %v278, %v282
        %vm284 = vweird.f32 %v267
        %vm285 = vweird.f32 %v278
        %vm286 = vmor %vm284, %vm285
        %v287 = vsel %vm286, %v278, %v283
        %v290 = vrot.slane %v287, 4
        %v291 = vsel %vm216, %v277, %v290
        %v293 = vmul.f32 %v265, %v291
        %v294 = vld [vmem:[%s1] sm:$0xf]
        %v295 = vld [vmem:[%s2] sm:$0xf]
        %297 = vset.pattern.permute.xlu0 0
        %298 = vperm.xlu0 %297, %v295
        %v299 = vpop.permute.xlu0 %298
        %302 = vst [vmem:[#allocation1] ss:$2 sm:$0xff] %v293
        %v303 = vld.sshfl [vmem:[#allocation1] sm:$0xff pattern:$0x75316420]
        %v304 = vld.sshfl [vmem:[#allocation1 + $0x8] sm:$0xff pattern:$0x75316420]
        %vm305 = vcmask 31744
        %v307 = vsel %vm305, %v294, 0
        %v309 = vsel %vm216, %v303, 0
        %v311 = vsel %vm216, %v304, 0
        %313 = vmatpush.msra.mxu0 0.0
        %314 = vmatpush.msra.mxu0 0.0
        %315 = vmatpush.msra.mxu0 0.0
        %316 = vmatpush.msra.mxu0 0.0
        %317 = vmatpush.msra.mxu0 0.0
        %318 = vmatpush.msra.mxu0 0.0
        %319 = vmatpush.msra.mxu0 0.0
        %320 = vmatpush.msra.mxu0 0.0
        %321 = vmatpush.msra.mxu0 0.0
        %322 = vmatpush.msra.mxu0 0.0
        %323 = vmatpush.msra.mxu0 0.0
        %324 = vmatpush.msra.mxu0 0.0
        %325 = vmatpush.msra.mxu0 0.0
        %326 = vmatpush.msra.mxu0 0.0
        %327 = vmatpush.msra.mxu0 0.0
        %328 = vmatpush.msra.mxu0 %v309
        %329 = vmatmul.f32.gmra.mxu0 %v307
        %v330 = vpop.f32.mrf.mxu0
        %v331 = vadd.f32 %v299, %v330
        %332 = vdwg.mxu0
        %333 = vmatpush.msra.mxu0 0.0
        %334 = vmatpush.msra.mxu0 0.0
        %335 = vmatpush.msra.mxu0 0.0
        %336 = vmatpush.msra.mxu0 0.0
        %337 = vmatpush.msra.mxu0 0.0
        %338 = vmatpush.msra.mxu0 0.0
        %339 = vmatpush.msra.mxu0 0.0
        %340 = vmatpush.msra.mxu0 0.0
        %341 = vmatpush.msra.mxu0 0.0
        %342 = vmatpush.msra.mxu0 0.0
        %343 = vmatpush.msra.mxu0 0.0
        %344 = vmatpush.msra.mxu0 0.0
        %345 = vmatpush.msra.mxu0 0.0
        %346 = vmatpush.msra.mxu0 0.0
        %347 = vmatpush.msra.mxu0 0.0
        %348 = vmatpush.msra.mxu0 %v311
        %349 = vmatmul.f32.gmra.mxu0 %v307
        %v350 = vpop.f32.mrf.mxu0
        %v351 = vadd.f32 %v299, %v350
        %352 = vdwg.mxu0
        %v355 = vrot.slane %v351, 4
        %v356 = vsel %vm216, %v331, %v355
        %358 = vst [vmem:[%s206] sm:$0xff] %v356
        %s359 = sand.u32 %s112, 1
        %s360 = scalar_lea.sflag [#allocation4], %s359
        %s361 = sand.u32 %s112, 1
        %s362 = smul.addr %s361, 8
        %s363 = scalar_lea.vmem [#allocation5], %s362
        // Predicated region
        $region37: #{tpu_custom_call.1} parent=31 // pred_check
          %p364 = pneg %p122
        $region38: #{tpu_custom_call.1} parent=31 // pred_check_branch
          %366 = sbr.rel (%p364) target = $region40
        $region39: #{tpu_custom_call.1} parent=31 // pred_region
          %s367 = smul.u32 2, %s25
          %369 = vsyncadd %s360, 0
          %s370 = smul.addr %s24, 2
          %s371 = sadd.s32 %s367, %s370
          %s372 = smul.addr %s371, 4
          %s373 = scalar_lea.hbm %s3, %s372
          %s375 = sshll.u32 %s363, 4
          %s376 = int_to_ptr.vmem [resolvable:$true] %s375
          %s377 = sshll.u32 %s373, 4
          %s378 = int_to_ptr.hbm [resolvable:$true] %s377
          %380 = dma.vmem_to_hbm [thread:$0]  %s376, 128, %s378, %s360
        $region40: #{tpu_custom_call.1} parent=31 // pred_fallthru
          _
      $region32: #{tpu_custom_call.1} parent=5 // pred_fallthru
        _
      %p381 = scmp.le.s32.totalorder 2, %s15
      // Predicated region
      $region41: #{tpu_custom_call.1} parent=5 // pred_check
        %p382 = pneg %p381
      $region42: #{tpu_custom_call.1} parent=5 // pred_check_branch
        %384 = sbr.rel (%p382) target = $region44
      $region43: #{tpu_custom_call.1} parent=5 // pred_region
        %s385 = ssub.s32 %s15, 2
        // Predicated region
        $region45: #{tpu_custom_call.1} parent=43 // pred_check
          %p386 = pneg %p128
        $region46: #{tpu_custom_call.1} parent=43 // pred_check_branch
          %388 = sbr.rel (%p386) target = $region48
        $region47: #{tpu_custom_call.1} parent=43 // pred_region
          %s389 = sand.u32 %s113, 1
          %s390 = scalar_lea.sflag [#allocation4], %s389
          %s391 = sand.u32 %s113, 1
          %s392 = smul.addr %s391, 8
          %s393 = scalar_lea.vmem [#allocation5], %s392
          %395 = dma.done %s390, 128
        $region48: #{tpu_custom_call.1} parent=43 // pred_fallthru
          _
      $region44: #{tpu_custom_call.1} parent=5 // pred_fallthru
        _
    $region6: #{tpu_custom_call.1} parent=1 // loop_footer
      %s19 = sadd.s32 1, %s15
    $region7: #{tpu_custom_call.1} parent=1 // loop_footer_branch
      %14 = sbr.rel target = $region3
    $region8: #{tpu_custom_call.1} parent=1 // loop_exit
      _
    %396 = vsyncpa [#allocation3], 1
    %s397 = scalar_lea.sflag [#allocation3], 1
    %398 = vsyncpa %s397, 1
    %399 = vsyncpa [#allocation4], 1
    %s400 = scalar_lea.sflag [#allocation4], 1
    %401 = vsyncpa %s400, 1

</llo_original>
